<compile_context>
chip_gen: v7x
topology: tpu7x:2x2x1
jax: 0.10.0
libtpu: 0.0.40
codegen_flags: <defaults>
</compile_context>

<pallas_src>
import functools

import jax
import jax.numpy as jnp
from jax import lax
from jax.experimental import pallas as pl
from jax.experimental.pallas import tpu as pltpu


def _ls_ce_kernel(x_ref, t_ref, out_ref, acc_ref, *,
                  smoothing, n_valid, tile_n, use_mxu_reduce):
    p = pl.program_id(0)
    t = pl.program_id(1)
    n_inner = pl.num_programs(1)

    @pl.when(t == 0)
    def _():
        acc_ref[...] = jnp.zeros_like(acc_ref)

    x = x_ref[...].astype(jnp.float32)                      # (TN, C)
    c = x.shape[-1]

    # Numerically-stable pieces along the lane (class) axis.
    m = jnp.max(x, axis=-1, keepdims=True)                  # (TN, 1)
    y = x - m                                               # (TN, C), reused 3x
    e = jnp.exp(y)                                          # EUP slot

    if use_mxu_reduce:
        # v7x: push the two plain row sums through the idle MXU (vmatmul slot)
        # to relieve the saturating VALU/XLU slots.
        ones = jnp.ones((c, 1), jnp.float32)
        sum_e = jnp.dot(e, ones, preferred_element_type=jnp.float32)  # (TN, 1)
        sum_y = jnp.dot(y, ones, preferred_element_type=jnp.float32)  # (TN, 1)
    else:
        sum_e = jnp.sum(e, axis=-1, keepdims=True)          # (TN, 1)
        sum_y = jnp.sum(y, axis=-1, keepdims=True)          # (TN, 1)

    lse = jnp.log(sum_e)                                    # (TN, 1)

    # One-hot-free fused loss:
    #   y_t  = y[i, target[i]]  (compare + select + row sum, padded target=-1
    #                            never matches col_ids >= 0)
    #   loss = lse - (1-s)*y_t - (s/C)*sum_y
    col_ids = lax.broadcasted_iota(jnp.int32, x.shape, 1)
    tgt = t_ref[...]                                        # (TN, 1) int32
    y_t = jnp.sum(jnp.where(col_ids == tgt, y, 0.0), axis=-1, keepdims=True)

    loss = lse - (1.0 - smoothing) * y_t - (smoothing / c) * sum_y   # (TN, 1)

    # Mask out rows added by batch padding.
    row_iota = lax.broadcasted_iota(jnp.int32, (tile_n, 1), 0)
    global_row = (p * n_inner + t) * tile_n + row_iota
    loss = jnp.where(global_row < n_valid, loss, 0.0)

    acc_ref[...] += loss                                    # VPU-only in hot loop

    @pl.when(t == n_inner - 1)
    def _():
        # Single cross-sublane reduce per parallel chunk.
        out_ref[...] = jnp.sum(acc_ref[...], keepdims=True)  # (1, 1)


def _tpu_generation_config():
    """Derive (is_v7x, n_par, block byte target, vmem-limit cap) from device."""
    kind = ""
    try:
        kind = (jax.devices()[0].device_kind or "").lower()
    except Exception:
        pass
    is_v7 = "v7" in kind
    try:
        vmem_cap = int(pltpu.get_tpu_info().vmem_capacity_bytes)
    except Exception:
        vmem_cap = (64 << 20) if is_v7 else (128 << 20)

    if is_v7:
        # 64 MiB VMEM / TC, 2 TCs/chip, 3.2 TB/s HBM: smaller blocks, tight cap.
        n_par = 2
        target_block_bytes = 8 << 20
        vmem_cap_limit = min(48 << 20, (vmem_cap * 3) // 4)
    else:
        # v5e / v6e: 128 MiB VMEM, single TC: one chunk, big blocks.
        n_par = 1
        target_block_bytes = 16 << 20
        vmem_cap_limit = min(96 << 20, (vmem_cap * 3) // 4)
    return is_v7, n_par, target_block_bytes, vmem_cap_limit


def _choose_tile_n(n, c, itemsize, n_par, target_block_bytes, max_tile=8192):
    # Rows that fit the per-block byte budget (double-buffered by Pallas).
    tn = target_block_bytes // max(1, c * itemsize)
    tn = min(tn, max_tile)
    # Don't tile past what one parallel chunk actually needs.
    per_chunk = -(-n // n_par)
    tn = min(tn, -(-per_chunk // 16) * 16)
    # Multiple of 16 so bf16 sublane packing (16, 128) is satisfied too.
    tn = max(16, (tn // 16) * 16)
    return int(tn)


def label_smoothing_cross_entropy(logits, target, smoothing=0.1, *,
                                  tile_n=None, n_par=None):
    """logits: (N, C) float (f32 or bf16), target: (N,) int. Returns scalar f32."""
    N, C = logits.shape
    itemsize = jnp.dtype(logits.dtype).itemsize

    is_v7, auto_n_par, target_block_bytes, vmem_cap_limit = _tpu_generation_config()
    if n_par is None:
        n_par = auto_n_par
    if tile_n is None:
        tile_n = _choose_tile_n(N, C, itemsize, n_par, target_block_bytes)

    # Pad the batch so it divides evenly into n_par * n_inner * tile_n rows.
    chunk = n_par * tile_n
    n_pad = -(-N // chunk) * chunk
    if n_pad != N:
        logits = jnp.pad(logits, ((0, n_pad - N), (0, 0)))
        target = jnp.pad(target, (0, n_pad - N), constant_values=-1)
    target2d = target.astype(jnp.int32).reshape(n_pad, 1)
    n_inner = n_pad // chunk

    # VMEM budget: double-buffered logits + target blocks, scratch, headroom.
    block_bytes = tile_n * C * itemsize
    need = 2 * block_bytes + 2 * tile_n * 4 + tile_n * 4 + (4 << 20)
    vmem_limit = int(min(max(need, 16 << 20), vmem_cap_limit))
    vmem_limit = int(max(vmem_limit, need))   # never below actual requirement

    kernel = functools.partial(
        _ls_ce_kernel, smoothing=float(smoothing), n_valid=N, tile_n=tile_n,
        use_mxu_reduce=is_v7,
    )

    partials = pl.pallas_call(
        kernel,
        out_shape=jax.ShapeDtypeStruct((n_par, 1), jnp.float32),
        grid_spec=pltpu.PrefetchScalarGridSpec(
            num_scalar_prefetch=0,
            grid=(n_par, n_inner),
            in_specs=[
                pl.BlockSpec((tile_n, C), lambda p, t: (p * n_inner + t, 0)),
                pl.BlockSpec((tile_n, 1), lambda p, t: (p * n_inner + t, 0)),
            ],
            out_specs=pl.BlockSpec((1, 1), lambda p, t: (p, 0)),
            scratch_shapes=[pltpu.VMEM((tile_n, 1), jnp.float32)],
        ),
        compiler_params=pltpu.CompilerParams(
            dimension_semantics=("parallel", "arbitrary"),
            vmem_limit_bytes=vmem_limit,
        ),
    )(logits, target2d)

    # Final mean over the *valid* rows, done in the wrapper.
    return jnp.sum(partials) / N


def _reference(logits, target, smoothing=0.1):
    logp = jax.nn.log_softmax(logits.astype(jnp.float32), axis=-1)
    nll = -jnp.take_along_axis(logp, target[:, None].astype(jnp.int32), axis=-1)[:, 0]
    smooth = -jnp.mean(logp, axis=-1)
    return jnp.mean((1.0 - smoothing) * nll + smoothing * smooth)


if __name__ == "__main__":
    key = jax.random.PRNGKey(0)
    k1, k2, k3, k4 = jax.random.split(key, 4)

    # Small shapes consistent with the module: N examples, C classes.
    # N deliberately NOT a multiple of the tile to exercise padding/masking.
    N, C = 19, 32
    logits = jax.random.normal(k1, (N, C), dtype=jnp.float32)
    target = jax.random.randint(k2, (N,), 0, C, dtype=jnp.int32)

    loss = label_smoothing_cross_entropy(logits, target, smoothing=0.1)
    loss = jax.block_until_ready(loss)
    ref = _reference(logits, target, smoothing=0.1)
    assert jnp.allclose(loss, ref, atol=1e-5, rtol=1e-5), (loss, ref)

    # bf16 storage path (kernel upcasts to f32 internally; halves HBM traffic).
    logits_bf16 = logits.astype(jnp.bfloat16)
    loss_bf = label_smoothing_cross_entropy(logits_bf16, target, smoothing=0.1)
    loss_bf = jax.block_until_ready(loss_bf)
    ref_bf = _reference(logits_bf16, target, smoothing=0.1)
    assert jnp.allclose(loss_bf, ref_bf, atol=1e-4, rtol=1e-4), (loss_bf, ref_bf)

    # Multi-step inner reduction path (n_inner > 1) with a forced small tile,
    # exercising the resident accumulator and final-row masking.
    N2, C2 = 500, 256
    logits2 = jax.random.normal(k3, (N2, C2), dtype=jnp.float32)
    target2 = jax.random.randint(k4, (N2,), 0, C2, dtype=jnp.int32)
    loss2 = label_smoothing_cross_entropy(logits2, target2, smoothing=0.1, tile_n=64)
    loss2 = jax.block_until_ready(loss2)
    ref2 = _reference(logits2, target2, smoothing=0.1)
    assert jnp.allclose(loss2, ref2, atol=1e-5, rtol=1e-5), (loss2, ref2)

    print("KERNEL_OK")
</pallas_src>

<mosaic_0001>
module attributes {stable_mosaic.version = 11 : i64} {
  func.func @_ls_ce_kernel(%arg0: i32, %arg1: i32, %arg2: memref<32x32xf32, #tpu.memory_space<vmem>>, %arg3: memref<32x1xi32, #tpu.memory_space<vmem>>, %arg4: memref<1x1xf32, #tpu.memory_space<vmem>>, %arg5: memref<32x1xf32, #tpu.memory_space<vmem>>) attributes {dimension_semantics = [#tpu.dimension_semantics<parallel>, #tpu.dimension_semantics<arbitrary>], iteration_bounds = array<i64: 1, 1>, scalar_prefetch = 0 : i64, scratch_operands = 1 : i64, tpu.core_type = #tpu.core_type<tc>, window_params = [{transform_indices = @transform_0, window_bounds = array<i64: 32, 32>}, {transform_indices = @transform_1, window_bounds = array<i64: 32, 1>}, {transform_indices = @transform_2, window_bounds = array<i64: 1, 1>}]} {
    %c0_i32 = arith.constant 0 : i32
    %0 = arith.cmpi eq, %arg1, %c0_i32 : i32
    %1 = arith.extui %0 : i1 to i32
    %c0_i32_0 = arith.constant 0 : i32
    %2 = arith.cmpi ne, %1, %c0_i32_0 : i32
    scf.if %2 {
      %cst_17 = arith.constant 0.000000e+00 : f32
      %44 = vector.broadcast %cst_17 : f32 to vector<32x1xf32>
      %c0_18 = arith.constant 0 : index
      %c0_19 = arith.constant 0 : index
      %45 = vector.load %arg5[%c0_18, %c0_19] : memref<32x1xf32, #tpu.memory_space<vmem>>, vector<32x1xf32>
      tpu.vector_store %arg5[%c0_18, %c0_19], %44 {strides = array<i32>} : memref<32x1xf32, #tpu.memory_space<vmem>>, vector<32x1xf32>,
    } else {
    }
    %c0 = arith.constant 0 : index
    %c0_1 = arith.constant 0 : index
    %3 = vector.load %arg2[%c0, %c0_1] : memref<32x32xf32, #tpu.memory_space<vmem>>, vector<32x32xf32>
    %cst = arith.constant dense<0xFF800000> : vector<32xf32>
    %4 = vector.multi_reduction <maximumf>, %3, %cst [1] : vector<32x32xf32> to vector<32xf32>
    %5 = vector.shape_cast %4 : vector<32xf32> to vector<32x1xf32>
    %6 = vector.broadcast %5 : vector<32x1xf32> to vector<32x32xf32>
    %7 = arith.subf %3, %6 : vector<32x32xf32>
    %8 = math.exp %7 : vector<32x32xf32>
    %cst_2 = arith.constant dense<0.000000e+00> : vector<32xf32>
    %9 = vector.multi_reduction <add>, %8, %cst_2 [1] : vector<32x32xf32> to vector<32xf32>
    %10 = vector.shape_cast %9 : vector<32xf32> to vector<32x1xf32>
    %cst_3 = arith.constant dense<0.000000e+00> : vector<32xf32>
    %11 = vector.multi_reduction <add>, %7, %cst_3 [1] : vector<32x32xf32> to vector<32xf32>
    %12 = vector.shape_cast %11 : vector<32xf32> to vector<32x1xf32>
    %13 = math.log %10 : vector<32x1xf32>
    %14 = tpu.iota {dimensions = array<i32: 1>} : vector<32x32xi32>
    %c0_4 = arith.constant 0 : index
    %c0_5 = arith.constant 0 : index
    %15 = vector.load %arg3[%c0_4, %c0_5] : memref<32x1xi32, #tpu.memory_space<vmem>>, vector<32x1xi32>
    %16 = vector.broadcast %15 : vector<32x1xi32> to vector<32x32xi32>
    %17 = arith.cmpi eq, %14, %16 : vector<32x32xi32>
    %cst_6 = arith.constant 0.000000e+00 : f32
    %18 = vector.broadcast %cst_6 : f32 to vector<32x32xf32>
    %19 = arith.select %17, %7, %18 : vector<32x32xi1>, vector<32x32xf32>
    %cst_7 = arith.constant dense<0.000000e+00> : vector<32xf32>
    %20 = vector.multi_reduction <add>, %19, %cst_7 [1] : vector<32x32xf32> to vector<32xf32>
    %21 = vector.shape_cast %20 : vector<32xf32> to vector<32x1xf32>
    %cst_8 = arith.constant 0.899999976 : f32
    %22 = vector.broadcast %cst_8 : f32 to vector<32x1xf32>
    %23 = arith.mulf %22, %21 : vector<32x1xf32>
    %24 = arith.subf %13, %23 : vector<32x1xf32>
    %cst_9 = arith.constant 3.125000e-03 : f32
    %25 = vector.broadcast %cst_9 : f32 to vector<32x1xf32>
    %26 = arith.mulf %25, %12 : vector<32x1xf32>
    %27 = arith.subf %24, %26 : vector<32x1xf32>
    %28 = tpu.iota {dimensions = array<i32: 0>} : vector<32x1xi32>
    %c1_i32 = arith.constant 1 : i32
    %29 = arith.muli %arg0, %c1_i32 : i32
    %30 = arith.addi %29, %arg1 : i32
    %c32_i32 = arith.constant 32 : i32
    %31 = arith.muli %30, %c32_i32 : i32
    %32 = vector.broadcast %31 : i32 to vector<32x1xi32>
    %33 = arith.addi %32, %28 : vector<32x1xi32>
    %c19_i32 = arith.constant 19 : i32
    %34 = vector.broadcast %c19_i32 : i32 to vector<32x1xi32>
    %35 = arith.cmpi slt, %33, %34 : vector<32x1xi32>
    %cst_10 = arith.constant 0.000000e+00 : f32
    %36 = vector.broadcast %cst_10 : f32 to vector<32x1xf32>
    %37 = arith.select %35, %27, %36 : vector<32x1xi1>, vector<32x1xf32>
    %c0_11 = arith.constant 0 : index
    %c0_12 = arith.constant 0 : index
    %38 = vector.load %arg5[%c0_11, %c0_12] : memref<32x1xf32, #tpu.memory_space<vmem>>, vector<32x1xf32>
    %39 = arith.addf %38, %37 : vector<32x1xf32>
    %c0_13 = arith.constant 0 : index
    %c0_14 = arith.constant 0 : index
    %40 = vector.load %arg5[%c0_13, %c0_14] : memref<32x1xf32, #tpu.memory_space<vmem>>, vector<32x1xf32>
    tpu.vector_store %arg5[%c0_13, %c0_14], %39 {strides = array<i32>} : memref<32x1xf32, #tpu.memory_space<vmem>>, vector<32x1xf32>,
    %c0_i32_15 = arith.constant 0 : i32
    %41 = arith.cmpi eq, %arg1, %c0_i32_15 : i32
    %42 = arith.extui %41 : i1 to i32
    %c0_i32_16 = arith.constant 0 : i32
    %43 = arith.cmpi ne, %42, %c0_i32_16 : i32
    scf.if %43 {
      %c0_17 = arith.constant 0 : index
      %c0_18 = arith.constant 0 : index
      %44 = vector.load %arg5[%c0_17, %c0_18] : memref<32x1xf32, #tpu.memory_space<vmem>>, vector<32x1xf32>
      %45 = vector.shape_cast %44 : vector<32x1xf32> to vector<1x32x1xf32>
      %cst_19 = arith.constant dense<0.000000e+00> : vector<1xf32>
      %46 = vector.multi_reduction <add>, %45, %cst_19 [1, 2] : vector<1x32x1xf32> to vector<1xf32>
      %47 = vector.shape_cast %46 : vector<1xf32> to vector<1x1x1xf32>
      %48 = vector.extract %47[0, 0, 0] : f32 from vector<1x1x1xf32>
      %49 = vector.broadcast %48 : f32 to vector<1x1xf32>
      %c0_20 = arith.constant 0 : index
      %c0_21 = arith.constant 0 : index
      %50 = vector.load %arg4[%c0_20, %c0_21] : memref<1x1xf32, #tpu.memory_space<vmem>>, vector<1x1xf32>
      tpu.vector_store %arg4[%c0_20, %c0_21], %49 {strides = array<i32>} : memref<1x1xf32, #tpu.memory_space<vmem>>, vector<1x1xf32>,
    } else {
    }
    return
  }
  func.func @transform_0(%arg0: i32, %arg1: i32) -> (i32, i32) {
    %c1_i32 = arith.constant 1 : i32
    %0 = arith.muli %arg0, %c1_i32 : i32
    %1 = arith.addi %0, %arg1 : i32
    %c0_i32 = arith.constant 0 : i32
    %c0_i32_0 = arith.constant 0 : i32
    return %1, %c0_i32 : i32, i32
  }
  func.func @transform_1(%arg0: i32, %arg1: i32) -> (i32, i32) {
    %c1_i32 = arith.constant 1 : i32
    %0 = arith.muli %arg0, %c1_i32 : i32
    %1 = arith.addi %0, %arg1 : i32
    %c0_i32 = arith.constant 0 : i32
    %c0_i32_0 = arith.constant 0 : i32
    return %1, %c0_i32 : i32, i32
  }
  func.func @transform_2(%arg0: i32, %arg1: i32) -> (i32, i32) {
    %c0_i32 = arith.constant 0 : i32
    %c0_i32_0 = arith.constant 0 : i32
    return %arg0, %c0_i32 : i32, i32
  }
}

</mosaic_0001>

<llo_original>
// kernel: tpu_custom_call.1
$region0: #{tpu_custom_call.1}
  #allocation0 [shape = 'u32[]', space=smem, size = 0x4, offset = 0x4, fixed_abs, tag = 'smem constant byte address 0x4 - core index']
  #allocation1 [shape = 'u32[144,128]{1,0:T(1,128)}', space=vmem, size = 0x12000, scoped, tag = 'internal scratch']
  #allocation2 [shape = 'f32[32,1]{1,0:T(8,128)}', space=vmem, size = 0x4000, scoped, tag = 'scratch operand']
  %s0 = inlined_call_operand.vmem [shape: f32[32,32], index: 0, kind: input, shape index: {}]
  %s1 = inlined_call_operand.vmem [shape: s32[32,1], index: 1, kind: input, shape index: {}]
  %s2 = inlined_call_operand.hbm [shape: f32[1,1], index: 2, kind: output, shape index: {}]
  %s3 = sld [smem:[#allocation0]]
  $region26: #{tpu_custom_call.1} parent=0
    _
  %s5 = ssub.s32 1, %s3
  %s6 = scalar_select 0, %s5, %s3
  $region1: #{tpu_custom_call.1} parent=0
    #allocation3 [shape = 'u8[512]{0}', space=vmem, size = 0x400, scoped, tag = 'output window, operand 0, single buffered']
    #allocation4 [shape = 's32[1]{0}', space=sflag, size = 0x4, scoped, tag = 'scoped memory for tpu_custom_call.1']
    %7 = vsyncpa [#allocation4], 0
    // Predicated region
    $region2: #{tpu_custom_call.1} parent=1 // pred_check
      _
    $region3: #{tpu_custom_call.1} parent=1 // pred_check_branch
      %9 = sbr.rel (0) target = $region5
    $region4: #{tpu_custom_call.1} parent=1 // pred_region
      %s10 = sadd.s32 0, 0
      %s11 = smul.u32 4, %s10
      %p12 = scmp.lt.s32.totalorder %s11, 3
      %s13 = scalar_select %p12, %s11, 3
      %s14 = smul.addr %s13, 8
      %s15 = scalar_lea.vmem %s0, %s14
      %s16 = sadd.s32 0, 0
      %s17 = smul.u32 4, %s16
    $region5: #{tpu_custom_call.1} parent=1 // pred_fallthru
      _
    // Predicated region
    $region6: #{tpu_custom_call.1} parent=1 // pred_check
      _
    $region7: #{tpu_custom_call.1} parent=1 // pred_check_branch
      %19 = sbr.rel (0) target = $region9
    $region8: #{tpu_custom_call.1} parent=1 // pred_region
      %s20 = sadd.s32 0, 0
      %s21 = smul.u32 4, %s20
      %p22 = scmp.lt.s32.totalorder %s21, 3
      %s23 = scalar_select %p22, %s21, 3
      %s24 = smul.addr %s23, 8
      %s25 = scalar_lea.vmem %s1, %s24
      %s26 = sadd.s32 0, 0
      %s27 = smul.u32 4, %s26
    $region9: #{tpu_custom_call.1} parent=1 // pred_fallthru
      _
    %s28 = sadd.s32 0, 0
    %s29 = smul.u32 4, %s28
    %p30 = scmp.lt.s32.totalorder %s29, 3
    %s31 = scalar_select %p30, %s29, 3
    %s32 = smul.addr %s31, 8
    %s33 = scalar_lea.vmem %s0, %s32
    %s34 = sadd.s32 0, 0
    %s35 = smul.u32 4, %s34
    %p36 = scmp.lt.s32.totalorder %s35, 3
    %s37 = scalar_select %p36, %s35, 3
    %s38 = smul.addr %s37, 8
    %s39 = scalar_lea.vmem %s1, %s38
    %s40 = sadd.s32 0, 0
    %s41 = smul.u32 4, %s40
    %p42 = scmp.lt.s32.totalorder %s41, 3
    %s43 = scalar_select %p42, %s41, 3
    %s44 = smul.addr %s43, 8
    %s45 = scalar_lea.vmem %s0, %s44
    %s46 = sadd.s32 0, 0
    %s47 = smul.u32 4, %s46
    %s48 = sadd.s32 0, 0
    %s49 = smul.u32 4, %s48
    %p50 = scmp.lt.s32.totalorder %s49, 3
    %s51 = scalar_select %p50, %s49, 3
    %s52 = smul.addr %s51, 8
    %s53 = scalar_lea.vmem %s1, %s52
    %s54 = sadd.s32 0, 0
    %s55 = smul.u32 4, %s54
    %p56 = scmp.eq.s32.totalorder 0, 0
    // Predicated region
    $region10: #{tpu_custom_call.1} parent=1 // pred_check
      %p57 = pneg %p56
    $region11: #{tpu_custom_call.1} parent=1 // pred_check_branch
      %59 = sbr.rel (%p57) target = $region13
    $region12: #{tpu_custom_call.1} parent=1 // pred_region
      %vm60 = vcmask 7168
      %61 = vst.msk [vmem:[#allocation2] sm:$0xff] %vm60, 0.0
      %62 = vst.msk [vmem:[#allocation2 + $0x8] sm:$0xff] %vm60, 0.0
      %63 = vst.msk [vmem:[#allocation2 + $0x10] sm:$0xff] %vm60, 0.0
      %64 = vst.msk [vmem:[#allocation2 + $0x18] sm:$0xff] %vm60, 0.0
    $region13: #{tpu_custom_call.1} parent=1 // pred_fallthru
      _
    %v65 = vld [vmem:[%s45] sm:$0xff]
    %v66 = vld [vmem:[%s45 + $0x8] sm:$0xff]
    %v67 = vld [vmem:[%s45 + $0x10] sm:$0xff]
    %v68 = vld [vmem:[%s45 + $0x18] sm:$0xff]
    %vm69 = vcmask 261120
    %v70 = vsel %vm69, %v65, -inf
    %71 = vmax.xlane.f32.xlu0 %v70
    %v72 = vpop.xlane.xlu0 %71
    %v73 = vsel %vm69, %v66, -inf
    %74 = vmax.xlane.f32.xlu0 %v73
    %v75 = vpop.xlane.xlu0 %74
    %v76 = vsel %vm69, %v67, -inf
    %77 = vmax.xlane.f32.xlu0 %v76
    %v78 = vpop.xlane.xlu0 %77
    %v79 = vsel %vm69, %v68, -inf
    %80 = vmax.xlane.f32.xlu0 %v79
    %v81 = vpop.xlane.xlu0 %80
    %v82 = vsub.f32 %v65, %v72
    %v83 = vsub.f32 %v66, %v75
    %v84 = vsub.f32 %v67, %v78
    %v85 = vsub.f32 %v68, %v81
    %v86 = vmul.f32 %v82, 1.442695
    %v87 = vpow.pop %v86
    %v88 = vmul.f32 %v83, 1.442695
    %v89 = vpow.pop %v88
    %v90 = vmul.f32 %v84, 1.442695
    %v91 = vpow.pop %v90
    %v92 = vmul.f32 %v85, 1.442695
    %v93 = vpow.pop %v92
    %v94 = vsel %vm69, %v87, 0.0
    %95 = vadd.xlane.f32.xlu0 %v94
    %v96 = vpop.xlane.xlu0 %95
    %v97 = vsel %vm69, %v89, 0.0
    %98 = vadd.xlane.f32.xlu0 %v97
    %v99 = vpop.xlane.xlu0 %98
    %v100 = vsel %vm69, %v91, 0.0
    %101 = vadd.xlane.f32.xlu0 %v100
    %v102 = vpop.xlane.xlu0 %101
    %v103 = vsel %vm69, %v93, 0.0
    %104 = vadd.xlane.f32.xlu0 %v103
    %v105 = vpop.xlane.xlu0 %104
    %v106 = vsel %vm69, %v82, 0.0
    %107 = vadd.xlane.f32.xlu0 %v106
    %v108 = vpop.xlane.xlu0 %107
    %v109 = vsel %vm69, %v83, 0.0
    %110 = vadd.xlane.f32.xlu0 %v109
    %v111 = vpop.xlane.xlu0 %110
    %v112 = vsel %vm69, %v84, 0.0
    %113 = vadd.xlane.f32.xlu0 %v112
    %v114 = vpop.xlane.xlu0 %113
    %v115 = vsel %vm69, %v85, 0.0
    %116 = vadd.xlane.f32.xlu0 %v115
    %v117 = vpop.xlane.xlu0 %116
    %v118 = vlog2.pop %v96
    %v119 = vmul.f32 %v118, 0.6931472
    %v120 = vlog2.pop %v99
    %v121 = vmul.f32 %v120, 0.6931472
    %v122 = vlog2.pop %v102
    %v123 = vmul.f32 %v122, 0.6931472
    %v124 = vlog2.pop %v105
    %v125 = vmul.f32 %v124, 0.6931472
    %v126 = vlaneseq
    %v127 = vand.u32 %v126, 127
    %v128 = vld [vmem:[%s53] sm:$0xff]
    %v129 = vld [vmem:[%s53 + $0x8] sm:$0xff]
    %v130 = vld [vmem:[%s53 + $0x10] sm:$0xff]
    %v131 = vld [vmem:[%s53 + $0x18] sm:$0xff]
    %132 = vset.pattern.permute.xlu0 0
    %133 = vperm.xlu0 %132, %v128
    %v134 = vpop.permute.xlu0 %133
    %135 = vset.pattern.permute.xlu0 0
    %136 = vperm.xlu0 %135, %v129
    %v137 = vpop.permute.xlu0 %136
    %138 = vset.pattern.permute.xlu0 0
    %139 = vperm.xlu0 %138, %v130
    %v140 = vpop.permute.xlu0 %139
    %141 = vset.pattern.permute.xlu0 0
    %142 = vperm.xlu0 %141, %v131
    %v143 = vpop.permute.xlu0 %142
    %vm144 = vcmp.eq.s32.totalorder %v127, %v134
    %vm145 = vcmp.eq.s32.totalorder %v127, %v137
    %vm146 = vcmp.eq.s32.totalorder %v127, %v140
    %vm147 = vcmp.eq.s32.totalorder %v127, %v143
    %v148 = vsel %vm144, %v82, 0.0
    %v149 = vsel %vm145, %v83, 0.0
    %v150 = vsel %vm146, %v84, 0.0
    %v151 = vsel %vm147, %v85, 0.0
    %v152 = vsel %vm69, %v148, 0.0
    %153 = vadd.xlane.f32.xlu0 %v152
    %v154 = vpop.xlane.xlu0 %153
    %v155 = vsel %vm69, %v149, 0.0
    %156 = vadd.xlane.f32.xlu0 %v155
    %v157 = vpop.xlane.xlu0 %156
    %v158 = vsel %vm69, %v150, 0.0
    %159 = vadd.xlane.f32.xlu0 %v158
    %v160 = vpop.xlane.xlu0 %159
    %v161 = vsel %vm69, %v151, 0.0
    %162 = vadd.xlane.f32.xlu0 %v161
    %v163 = vpop.xlane.xlu0 %162
    %v164 = vmul.f32 %v154, 0.9
    %v165 = vmul.f32 %v157, 0.9
    %v166 = vmul.f32 %v160, 0.9
    %v167 = vmul.f32 %v163, 0.9
    %v168 = vsub.f32 %v119, %v164
    %v169 = vsub.f32 %v121, %v165
    %v170 = vsub.f32 %v123, %v166
    %v171 = vsub.f32 %v125, %v167
    %v172 = vmul.f32 %v108, 0.003125
    %v173 = vmul.f32 %v111, 0.003125
    %v174 = vmul.f32 %v114, 0.003125
    %v175 = vmul.f32 %v117, 0.003125
    %v176 = vsub.f32 %v168, %v172
    %v177 = vsub.f32 %v169, %v173
    %v178 = vsub.f32 %v170, %v174
    %v179 = vsub.f32 %v171, %v175
    %v180 = vlaneseq
    %v181 = vshrl.u32 %v180, 7
    %v182 = vadd.s32 %v181, 8
    %v183 = vadd.s32 %v181, 16
    %v184 = vadd.s32 %v181, 24
    %s185 = sadd.s32 0, 0
    %s186 = smul.u32 %s185, 32
    %v187 = vstv %s186
    %v188 = vadd.s32 %v187, %v181
    %v189 = vadd.s32 %v187, %v182
    %v190 = vadd.s32 %v187, %v183
    %v191 = vadd.s32 %v187, %v184
    %vm192 = vcmp.lt.s32.totalorder %v188, 19
    %vm193 = vcmp.lt.s32.totalorder %v189, 19
    %vm194 = vcmp.lt.s32.totalorder %v190, 19
    %vm195 = vcmp.lt.s32.totalorder %v191, 19
    %v196 = vsel %vm192, %v176, 0.0
    %v197 = vsel %vm193, %v177, 0.0
    %v198 = vsel %vm194, %v178, 0.0
    %v199 = vsel %vm195, %v179, 0.0
    %v200 = vld [vmem:[#allocation2] sm:$0xff]
    %v201 = vld [vmem:[#allocation2 + $0x8] sm:$0xff]
    %v202 = vld [vmem:[#allocation2 + $0x10] sm:$0xff]
    %v203 = vld [vmem:[#allocation2 + $0x18] sm:$0xff]
    %v204 = vadd.f32 %v200, %v196
    %v205 = vadd.f32 %v201, %v197
    %v206 = vadd.f32 %v202, %v198
    %v207 = vadd.f32 %v203, %v199
    %vm208 = vcmask 7168
    %209 = vst.msk [vmem:[#allocation2] sm:$0xff] %vm208, %v204
    %210 = vst.msk [vmem:[#allocation2 + $0x8] sm:$0xff] %vm208, %v205
    %211 = vst.msk [vmem:[#allocation2 + $0x10] sm:$0xff] %vm208, %v206
    %212 = vst.msk [vmem:[#allocation2 + $0x18] sm:$0xff] %vm208, %v207
    // Predicated region
    $region14: #{tpu_custom_call.1} parent=1 // pred_check
      %p213 = pneg %p56
    $region15: #{tpu_custom_call.1} parent=1 // pred_check_branch
      %215 = sbr.rel (%p213) target = $region17
    $region16: #{tpu_custom_call.1} parent=1 // pred_region
      %v216 = vld [vmem:[#allocation2] sm:$0xff]
      %v217 = vld [vmem:[#allocation2 + $0x8] sm:$0xff]
      %v218 = vld [vmem:[#allocation2 + $0x10] sm:$0xff]
      %v219 = vld [vmem:[#allocation2 + $0x18] sm:$0xff]
      %v220 = vsel %vm208, %v216, 0.0
      %v221 = vsel %vm208, %v217, 0.0
      %v222 = vadd.f32 %v220, %v221
      %v223 = vsel %vm208, %v218, 0.0
      %v224 = vadd.f32 %v222, %v223
      %v225 = vsel %vm208, %v219, 0.0
      %v226 = vadd.f32 %v224, %v225
      %227 = vadd.xlane.f32.xlu0 %v226
      %v228 = vpop.xlane.xlu0 %227
      %v229 = vrot.slane %v228, 4
      %v230 = vadd.f32 %v228, %v229
      %v231 = vrot.slane %v230, 2
      %v232 = vadd.f32 %v230, %v231
      %v233 = vrot.slane %v232, 1
      %v234 = vadd.f32 %v232, %v233
      %s235 = vtos %v234
      %v236 = vstv %s235
      %vm237 = vcmask 0
      %238 = vst.msk [vmem:[#allocation3] sm:$0x1] %vm237, %v236
    $region17: #{tpu_custom_call.1} parent=1 // pred_fallthru
      _
    // Predicated region
    $region18: #{tpu_custom_call.1} parent=1 // pred_check
      _
    $region19: #{tpu_custom_call.1} parent=1 // pred_check_branch
      %240 = sbr.rel (0) target = $region21
    $region20: #{tpu_custom_call.1} parent=1 // pred_region
      %s242 = ssub.s32 16, 16
      %243 = vsyncadd [#allocation4], %s242
      %s245 = sshll.u32 [#allocation3], 4
      %s246 = int_to_ptr.vmem [resolvable:$true] %s245
      %248 = dma.vmem_to_hbm [thread:$0]  %s246, 16, %s2, [#allocation4]
    $region21: #{tpu_custom_call.1} parent=1 // pred_fallthru
      _
    // Predicated region
    $region22: #{tpu_custom_call.1} parent=1 // pred_check
      _
    $region23: #{tpu_custom_call.1} parent=1 // pred_check_branch
      %250 = sbr.rel (0) target = $region25
    $region24: #{tpu_custom_call.1} parent=1 // pred_region
      %251 = dma.done [#allocation4], 16
    $region25: #{tpu_custom_call.1} parent=1 // pred_fallthru
      _
    %252 = vsyncpa [#allocation4], 1

</llo_original>
